<compile_context>
chip_gen: v6e
topology: v6e:2x2x1
jax: 0.10.0
libtpu: 0.0.40
codegen_flags: <defaults>
</compile_context>

<pallas_src>
import functools

import jax
import jax.numpy as jnp
import numpy as np
from jax import lax
from jax.experimental import pallas as pl
from jax.experimental.pallas import tpu as pltpu

NDOF = 7               # robot joints
N_EE_ROWS = 6          # 3 linear + 3 angular jacobian rows
N_GRIPPER = 2          # gripper dofs appended to the state
ROW_PAD = 8            # NDOF padded to a full sublane group for aligned slices
CHUNK = 128            # lane chunk processed fully register-resident
DEFAULT_TILE_B = 4096  # batch tile per grid step (amortizes ~0.35us step cost)


def _round_up(x, m):
    return ((x + m - 1) // m) * m


def manipulability_kernel(x_ref, w_ref, b_ref, o_ref, *,
                          thresh, weight, weight_over_thresh, n_chunks):
    # x_ref: (TILE_B, NDOF)             joint states, native layout (batch on sublanes)
    # w_ref: (N_EE_ROWS*ROW_PAD, NDOF)  fused, row-padded jacobian weights
    # b_ref: (N_EE_ROWS*ROW_PAD, 1)     constant gripper contribution
    # o_ref: (1, TILE_B)                lane-dense cost row

    def chunk_body(c, carry):
        start = pl.multiple_of(c * CHUNK, CHUNK)
        xc = x_ref[pl.ds(start, CHUNK), :]                        # (128, NDOF)

        # ---- synthetic end-effector jacobian (stands in for the FK model) --
        # One MXU push per chunk: (48, NDOF) x (128, NDOF)^T -> (48, 128) via
        # NT dot_general; the small on-chip transpose rides on the idle XLU.
        z = lax.dot_general(w_ref[...], xc, (((1,), (1,)), ((), ())),
                            preferred_element_type=jnp.float32)   # (48, 128)
        jac = jnp.tanh(z + b_ref[...])                            # padded rows = 0

        # ---- J @ J^T : 21 upper-triangle entries, each one (1, 128) vreg ----
        blocks = [jac[r * ROW_PAD:(r + 1) * ROW_PAD, :]
                  for r in range(N_EE_ROWS)]
        a = {}
        for i in range(N_EE_ROWS):
            for j in range(i, N_EE_ROWS):
                a[(i, j)] = jnp.sum(blocks[i] * blocks[j], axis=0,
                                    keepdims=True)                # (1, 128)

        # ---- det(J J^T) via symmetric (pivotless) Gaussian elimination ------
        # J J^T is symmetric PSD, so pivots are >= 0 up to round-off.  Pivots
        # are clamped relative to the trace so rank-deficient inputs cannot
        # blow the row updates up to inf; any residual inf/NaN det is mapped
        # to 0 below (matching the PyTorch `score[score != score] = 0`).
        trace = (a[(0, 0)] + a[(1, 1)] + a[(2, 2)]
                 + a[(3, 3)] + a[(4, 4)] + a[(5, 5)])
        eps = 1e-12 * trace + 1e-30
        det = jnp.ones_like(trace)
        for k in range(N_EE_ROWS):
            pivot = a[(k, k)]
            det = det * pivot
            p_safe = jnp.maximum(pivot, eps)
            inv_p = pl.reciprocal(p_safe, approx=True)            # EUP slot
            inv_p = inv_p * (2.0 - p_safe * inv_p)                # Newton step
            for i in range(k + 1, N_EE_ROWS):
                factor = a[(k, i)] * inv_p                # == a[(i,k)] (symmetry)
                for j in range(i, N_EE_ROWS):
                    a[(i, j)] = a[(i, j)] - factor * a[(k, j)]

        # ---- manipulability score -> cost ------------------------------------
        det = jnp.where(jnp.abs(det) < jnp.inf, det, 0.0)         # NaN/inf -> 0
        s = jnp.sqrt(jnp.maximum(det, 0.0))
        s = jnp.minimum(s, thresh)                                # score[score>t]=t
        # cost = weight * (thresh - s) / thresh, constants pre-fused.
        # GaussianProjection with n=c=s=r=0 is the identity.
        o_ref[:, pl.ds(start, CHUNK)] = (
            weight - s * weight_over_thresh).astype(o_ref.dtype)
        return carry

    lax.fori_loop(0, n_chunks, chunk_body, None)


def _choose_tile_b(batch, tile_b, num_tensorcores):
    padded = _round_up(batch, CHUNK)
    tile_b = min(_round_up(tile_b, CHUNK), padded)
    if num_tensorcores > 1:
        # Megacore chips (v7x): target >= 2 grid steps per TensorCore so both
        # cores get work and per-core DMA prologue/epilogue is pipelined.
        # Single-TC chips (v5e/v6e) keep the largest tile (no forced split).
        per_step = _round_up(pl.cdiv(padded, 2 * num_tensorcores), CHUNK)
        tile_b = max(CHUNK, min(tile_b, per_step))
    return tile_b


def manipulability_cost(state, gripper_state, w_jac, *, thresh=0.1, weight=1.0,
                        tile_b=DEFAULT_TILE_B, num_tensorcores=1):
    """state: (B, NDOF) f32; gripper_state: (N_GRIPPER,) f32;
    w_jac: (6, NDOF+N_GRIPPER, NDOF) f32.  Returns cost (B,) f32."""
    b = state.shape[0]
    tile_b = _choose_tile_b(b, tile_b, num_tensorcores)
    padded_b = _round_up(b, tile_b)

    state = state.astype(jnp.float32)
    if padded_b != b:                 # arbitrary batch: pad rows, slice output
        state = jnp.pad(state, ((0, padded_b - b), (0, 0)))
    w_jac = w_jac.astype(jnp.float32)
    gripper = gripper_state.astype(jnp.float32)

    # Fused, row-padded jacobian weights: wf[8*r + n, d] = w_jac[r, d, n]
    wf = jnp.transpose(w_jac[:, :NDOF, :], (0, 2, 1))             # (6, 7, 7)
    wf = jnp.pad(wf, ((0, 0), (0, ROW_PAD - NDOF), (0, 0)))       # (6, 8, 7)
    wf = wf.reshape(N_EE_ROWS * ROW_PAD, NDOF)                    # (48, 7)

    # Constant gripper contribution folded into a per-row bias: no HBM-side
    # concat/tile of an augmented (B, 9) state.
    bias = jnp.einsum("g,rgn->rn", gripper, w_jac[:, NDOF:, :])   # (6, 7)
    bias = jnp.pad(bias, ((0, 0), (0, ROW_PAD - NDOF)))           # (6, 8)
    bias = bias.reshape(N_EE_ROWS * ROW_PAD, 1)                   # (48, 1)

    kernel = functools.partial(
        manipulability_kernel,
        thresh=float(thresh),
        weight=float(weight),
        weight_over_thresh=float(weight) / float(thresh),
        n_chunks=tile_b // CHUNK)

    out = pl.pallas_call(
        kernel,
        out_shape=jax.ShapeDtypeStruct((1, padded_b), jnp.float32),
        grid_spec=pltpu.PrefetchScalarGridSpec(
            num_scalar_prefetch=0,
            grid=(padded_b // tile_b,),
            in_specs=[
                pl.BlockSpec((tile_b, NDOF), lambda i: (i, 0)),
                pl.BlockSpec((N_EE_ROWS * ROW_PAD, NDOF), lambda i: (0, 0)),
                pl.BlockSpec((N_EE_ROWS * ROW_PAD, 1), lambda i: (0, 0)),
            ],
            out_specs=pl.BlockSpec((1, tile_b), lambda i: (0, i)),
        ),
        compiler_params=pltpu.CompilerParams(
            dimension_semantics=("parallel",)),
    )(state, wf, bias)
    return out[0, :b]


def reference_cost(state, gripper_state, w_jac, *, thresh=0.1, weight=1.0):
    """Pure-JAX reference mirroring the PyTorch forward."""
    b = state.shape[0]
    aug = jnp.concatenate(
        [state, jnp.tile(gripper_state[None, :], (b, 1))], axis=1)
    jac = jnp.tanh(jnp.einsum("bd,rdn->brn", aug, w_jac))         # (B, 6, NDOF)
    jjt = jnp.einsum("brn,bsn->brs", jac, jac)                    # (B, 6, 6)
    score = jnp.sqrt(jnp.linalg.det(jjt))
    score = jnp.where(jnp.isnan(score), 0.0, score)
    score = jnp.minimum(score, thresh)
    score = (thresh - score) / thresh
    return weight * score


if __name__ == "__main__":
    key = jax.random.PRNGKey(0)
    k_state, k_w = jax.random.split(key)

    batch = 200            # deliberately NOT a multiple of 128 (padding path)
    thresh = 0.1
    weight = 1.0

    # deterministic inputs / parameters
    state = jax.random.normal(k_state, (batch, NDOF), dtype=jnp.float32)
    gripper_state = jnp.array([0.04, 0.04], dtype=jnp.float32)    # fixed gripper
    # synthetic "differentiable model" jacobian weights (small scale so that
    # manipulability scores straddle the threshold)
    w_jac = 0.1 * jax.random.normal(
        k_w, (N_EE_ROWS, NDOF + N_GRIPPER, NDOF), dtype=jnp.float32)

    cost = manipulability_cost(
        state, gripper_state, w_jac, thresh=thresh, weight=weight)
    cost = jax.block_until_ready(cost)

    ref = jax.block_until_ready(
        reference_cost(state, gripper_state, w_jac, thresh=thresh,
                       weight=weight))

    assert cost.shape == (batch,)
    err = np.max(np.abs(np.asarray(cost) - np.asarray(ref)))
    assert np.allclose(np.asarray(cost), np.asarray(ref),
                       rtol=2e-3, atol=3e-4), f"max abs err {err}"
    print("KERNEL_OK")
</pallas_src>

<mosaic_0001>
module attributes {stable_mosaic.version = 11 : i64} {
  func.func @manipulability_kernel(%arg0: i32, %arg1: memref<256x7xf32, #tpu.memory_space<vmem>>, %arg2: memref<48x7xf32, #tpu.memory_space<vmem>>, %arg3: memref<48x1xf32, #tpu.memory_space<vmem>>, %arg4: memref<1x256xf32, #tpu.memory_space<vmem>>) attributes {dimension_semantics = [#tpu.dimension_semantics<parallel>], iteration_bounds = array<i64: 1>, scalar_prefetch = 0 : i64, scratch_operands = 0 : i64, tpu.core_type = #tpu.core_type<tc>, window_params = [{transform_indices = @transform_0, window_bounds = array<i64: 256, 7>}, {pipeline_mode = #tpu.pipeline_mode<synchronous>, transform_indices = @transform_1, window_bounds = array<i64: 48, 7>}, {pipeline_mode = #tpu.pipeline_mode<synchronous>, transform_indices = @transform_2, window_bounds = array<i64: 48, 1>}, {transform_indices = @transform_3, window_bounds = array<i64: 1, 256>}]} {
    %c0_i32 = arith.constant 0 : i32
    %c2_i32 = arith.constant 2 : i32
    %0 = arith.addi %c0_i32, %c2_i32 : i32
    %c1_i32 = arith.constant 1 : i32
    scf.for %arg5 = %c0_i32 to %0 step %c1_i32  : i32 {
      %c128_i32 = arith.constant 128 : i32
      %1 = arith.muli %arg5, %c128_i32 : i32
      %2 = tpu.assume_multiple %1, 128 : i32
      %3 = arith.index_cast %2 : i32 to index
      %c0 = arith.constant 0 : index
      %4 = vector.load %arg1[%3, %c0] : memref<256x7xf32, #tpu.memory_space<vmem>>, vector<128x7xf32>
      %c0_1 = arith.constant 0 : index
      %c0_2 = arith.constant 0 : index
      %5 = vector.load %arg2[%c0_1, %c0_2] : memref<48x7xf32, #tpu.memory_space<vmem>>, vector<48x7xf32>
      %cst = arith.constant dense<0.000000e+00> : vector<48x128xf32>
      %6 = tpu.matmul %5, %4, %cst {dimension_numbers = #tpu.dot_dimension_numbers<[1], [1], [0], [0], [0, 0, 1, 0], [], []>} : vector<48x7xf32>, vector<128x7xf32>, vector<48x128xf32> -> vector<48x128xf32>
      %c0_3 = arith.constant 0 : index
      %c0_4 = arith.constant 0 : index
      %7 = vector.load %arg3[%c0_3, %c0_4] : memref<48x1xf32, #tpu.memory_space<vmem>>, vector<48x1xf32>
      %8 = vector.broadcast %7 : vector<48x1xf32> to vector<48x128xf32>
      %9 = arith.addf %6, %8 : vector<48x128xf32>
      %10 = math.tanh %9 : vector<48x128xf32>
      %11 = vector.extract_strided_slice %10 {offsets = [0, 0], sizes = [8, 128], strides = [1, 1]} : vector<48x128xf32> to vector<8x128xf32>
      %12 = vector.extract_strided_slice %10 {offsets = [8, 0], sizes = [8, 128], strides = [1, 1]} : vector<48x128xf32> to vector<8x128xf32>
      %13 = vector.extract_strided_slice %10 {offsets = [16, 0], sizes = [8, 128], strides = [1, 1]} : vector<48x128xf32> to vector<8x128xf32>
      %14 = vector.extract_strided_slice %10 {offsets = [24, 0], sizes = [8, 128], strides = [1, 1]} : vector<48x128xf32> to vector<8x128xf32>
      %15 = vector.extract_strided_slice %10 {offsets = [32, 0], sizes = [8, 128], strides = [1, 1]} : vector<48x128xf32> to vector<8x128xf32>
      %16 = vector.extract_strided_slice %10 {offsets = [40, 0], sizes = [8, 128], strides = [1, 1]} : vector<48x128xf32> to vector<8x128xf32>
      %17 = arith.mulf %11, %11 : vector<8x128xf32>
      %cst_5 = arith.constant dense<0.000000e+00> : vector<128xf32>
      %18 = vector.multi_reduction <add>, %17, %cst_5 [0] : vector<8x128xf32> to vector<128xf32>
      %19 = vector.shape_cast %18 : vector<128xf32> to vector<1x128xf32>
      %20 = arith.mulf %11, %12 : vector<8x128xf32>
      %cst_6 = arith.constant dense<0.000000e+00> : vector<128xf32>
      %21 = vector.multi_reduction <add>, %20, %cst_6 [0] : vector<8x128xf32> to vector<128xf32>
      %22 = vector.shape_cast %21 : vector<128xf32> to vector<1x128xf32>
      %23 = arith.mulf %11, %13 : vector<8x128xf32>
      %cst_7 = arith.constant dense<0.000000e+00> : vector<128xf32>
      %24 = vector.multi_reduction <add>, %23, %cst_7 [0] : vector<8x128xf32> to vector<128xf32>
      %25 = vector.shape_cast %24 : vector<128xf32> to vector<1x128xf32>
      %26 = arith.mulf %11, %14 : vector<8x128xf32>
      %cst_8 = arith.constant dense<0.000000e+00> : vector<128xf32>
      %27 = vector.multi_reduction <add>, %26, %cst_8 [0] : vector<8x128xf32> to vector<128xf32>
      %28 = vector.shape_cast %27 : vector<128xf32> to vector<1x128xf32>
      %29 = arith.mulf %11, %15 : vector<8x128xf32>
      %cst_9 = arith.constant dense<0.000000e+00> : vector<128xf32>
      %30 = vector.multi_reduction <add>, %29, %cst_9 [0] : vector<8x128xf32> to vector<128xf32>
      %31 = vector.shape_cast %30 : vector<128xf32> to vector<1x128xf32>
      %32 = arith.mulf %11, %16 : vector<8x128xf32>
      %cst_10 = arith.constant dense<0.000000e+00> : vector<128xf32>
      %33 = vector.multi_reduction <add>, %32, %cst_10 [0] : vector<8x128xf32> to vector<128xf32>
      %34 = vector.shape_cast %33 : vector<128xf32> to vector<1x128xf32>
      %35 = arith.mulf %12, %12 : vector<8x128xf32>
      %cst_11 = arith.constant dense<0.000000e+00> : vector<128xf32>
      %36 = vector.multi_reduction <add>, %35, %cst_11 [0] : vector<8x128xf32> to vector<128xf32>
      %37 = vector.shape_cast %36 : vector<128xf32> to vector<1x128xf32>
      %38 = arith.mulf %12, %13 : vector<8x128xf32>
      %cst_12 = arith.constant dense<0.000000e+00> : vector<128xf32>
      %39 = vector.multi_reduction <add>, %38, %cst_12 [0] : vector<8x128xf32> to vector<128xf32>
      %40 = vector.shape_cast %39 : vector<128xf32> to vector<1x128xf32>
      %41 = arith.mulf %12, %14 : vector<8x128xf32>
      %cst_13 = arith.constant dense<0.000000e+00> : vector<128xf32>
      %42 = vector.multi_reduction <add>, %41, %cst_13 [0] : vector<8x128xf32> to vector<128xf32>
      %43 = vector.shape_cast %42 : vector<128xf32> to vector<1x128xf32>
      %44 = arith.mulf %12, %15 : vector<8x128xf32>
      %cst_14 = arith.constant dense<0.000000e+00> : vector<128xf32>
      %45 = vector.multi_reduction <add>, %44, %cst_14 [0] : vector<8x128xf32> to vector<128xf32>
      %46 = vector.shape_cast %45 : vector<128xf32> to vector<1x128xf32>
      %47 = arith.mulf %12, %16 : vector<8x128xf32>
      %cst_15 = arith.constant dense<0.000000e+00> : vector<128xf32>
      %48 = vector.multi_reduction <add>, %47, %cst_15 [0] : vector<8x128xf32> to vector<128xf32>
      %49 = vector.shape_cast %48 : vector<128xf32> to vector<1x128xf32>
      %50 = arith.mulf %13, %13 : vector<8x128xf32>
      %cst_16 = arith.constant dense<0.000000e+00> : vector<128xf32>
      %51 = vector.multi_reduction <add>, %50, %cst_16 [0] : vector<8x128xf32> to vector<128xf32>
      %52 = vector.shape_cast %51 : vector<128xf32> to vector<1x128xf32>
      %53 = arith.mulf %13, %14 : vector<8x128xf32>
      %cst_17 = arith.constant dense<0.000000e+00> : vector<128xf32>
      %54 = vector.multi_reduction <add>, %53, %cst_17 [0] : vector<8x128xf32> to vector<128xf32>
      %55 = vector.shape_cast %54 : vector<128xf32> to vector<1x128xf32>
      %56 = arith.mulf %13, %15 : vector<8x128xf32>
      %cst_18 = arith.constant dense<0.000000e+00> : vector<128xf32>
      %57 = vector.multi_reduction <add>, %56, %cst_18 [0] : vector<8x128xf32> to vector<128xf32>
      %58 = vector.shape_cast %57 : vector<128xf32> to vector<1x128xf32>
      %59 = arith.mulf %13, %16 : vector<8x128xf32>
      %cst_19 = arith.constant dense<0.000000e+00> : vector<128xf32>
      %60 = vector.multi_reduction <add>, %59, %cst_19 [0] : vector<8x128xf32> to vector<128xf32>
      %61 = vector.shape_cast %60 : vector<128xf32> to vector<1x128xf32>
      %62 = arith.mulf %14, %14 : vector<8x128xf32>
      %cst_20 = arith.constant dense<0.000000e+00> : vector<128xf32>
      %63 = vector.multi_reduction <add>, %62, %cst_20 [0] : vector<8x128xf32> to vector<128xf32>
      %64 = vector.shape_cast %63 : vector<128xf32> to vector<1x128xf32>
      %65 = arith.mulf %14, %15 : vector<8x128xf32>
      %cst_21 = arith.constant dense<0.000000e+00> : vector<128xf32>
      %66 = vector.multi_reduction <add>, %65, %cst_21 [0] : vector<8x128xf32> to vector<128xf32>
      %67 = vector.shape_cast %66 : vector<128xf32> to vector<1x128xf32>
      %68 = arith.mulf %14, %16 : vector<8x128xf32>
      %cst_22 = arith.constant dense<0.000000e+00> : vector<128xf32>
      %69 = vector.multi_reduction <add>, %68, %cst_22 [0] : vector<8x128xf32> to vector<128xf32>
      %70 = vector.shape_cast %69 : vector<128xf32> to vector<1x128xf32>
      %71 = arith.mulf %15, %15 : vector<8x128xf32>
      %cst_23 = arith.constant dense<0.000000e+00> : vector<128xf32>
      %72 = vector.multi_reduction <add>, %71, %cst_23 [0] : vector<8x128xf32> to vector<128xf32>
      %73 = vector.shape_cast %72 : vector<128xf32> to vector<1x128xf32>
      %74 = arith.mulf %15, %16 : vector<8x128xf32>
      %cst_24 = arith.constant dense<0.000000e+00> : vector<128xf32>
      %75 = vector.multi_reduction <add>, %74, %cst_24 [0] : vector<8x128xf32> to vector<128xf32>
      %76 = vector.shape_cast %75 : vector<128xf32> to vector<1x128xf32>
      %77 = arith.mulf %16, %16 : vector<8x128xf32>
      %cst_25 = arith.constant dense<0.000000e+00> : vector<128xf32>
      %78 = vector.multi_reduction <add>, %77, %cst_25 [0] : vector<8x128xf32> to vector<128xf32>
      %79 = vector.shape_cast %78 : vector<128xf32> to vector<1x128xf32>
      %80 = arith.addf %19, %37 : vector<1x128xf32>
      %81 = arith.addf %80, %52 : vector<1x128xf32>
      %82 = arith.addf %81, %64 : vector<1x128xf32>
      %83 = arith.addf %82, %73 : vector<1x128xf32>
      %84 = arith.addf %83, %79 : vector<1x128xf32>
      %cst_26 = arith.constant 9.99999996E-13 : f32
      %85 = vector.broadcast %cst_26 : f32 to vector<1x128xf32>
      %86 = arith.mulf %85, %84 : vector<1x128xf32>
      %cst_27 = arith.constant 1.000000e-30 : f32
      %87 = vector.broadcast %cst_27 : f32 to vector<1x128xf32>
      %88 = arith.addf %86, %87 : vector<1x128xf32>
      %cst_28 = arith.constant 1.000000e+00 : f32
      %89 = vector.broadcast %cst_28 : f32 to vector<1x128xf32>
      %90 = arith.mulf %89, %19 : vector<1x128xf32>
      %91 = arith.maximumf %19, %88 : vector<1x128xf32>
      %92 = tpu.reciprocal %91 {approx = true} : vector<1x128xf32> -> vector<1x128xf32>
      %93 = arith.mulf %91, %92 : vector<1x128xf32>
      %cst_29 = arith.constant 2.000000e+00 : f32
      %94 = vector.broadcast %cst_29 : f32 to vector<1x128xf32>
      %95 = arith.subf %94, %93 : vector<1x128xf32>
      %96 = arith.mulf %92, %95 : vector<1x128xf32>
      %97 = arith.mulf %22, %96 : vector<1x128xf32>
      %98 = arith.mulf %97, %22 : vector<1x128xf32>
      %99 = arith.subf %37, %98 : vector<1x128xf32>
      %100 = arith.mulf %97, %25 : vector<1x128xf32>
      %101 = arith.subf %40, %100 : vector<1x128xf32>
      %102 = arith.mulf %97, %28 : vector<1x128xf32>
      %103 = arith.subf %43, %102 : vector<1x128xf32>
      %104 = arith.mulf %97, %31 : vector<1x128xf32>
      %105 = arith.subf %46, %104 : vector<1x128xf32>
      %106 = arith.mulf %97, %34 : vector<1x128xf32>
      %107 = arith.subf %49, %106 : vector<1x128xf32>
      %108 = arith.mulf %25, %96 : vector<1x128xf32>
      %109 = arith.mulf %108, %25 : vector<1x128xf32>
      %110 = arith.subf %52, %109 : vector<1x128xf32>
      %111 = arith.mulf %108, %28 : vector<1x128xf32>
      %112 = arith.subf %55, %111 : vector<1x128xf32>
      %113 = arith.mulf %108, %31 : vector<1x128xf32>
      %114 = arith.subf %58, %113 : vector<1x128xf32>
      %115 = arith.mulf %108, %34 : vector<1x128xf32>
      %116 = arith.subf %61, %115 : vector<1x128xf32>
      %117 = arith.mulf %28, %96 : vector<1x128xf32>
      %118 = arith.mulf %117, %28 : vector<1x128xf32>
      %119 = arith.subf %64, %118 : vector<1x128xf32>
      %120 = arith.mulf %117, %31 : vector<1x128xf32>
      %121 = arith.subf %67, %120 : vector<1x128xf32>
      %122 = arith.mulf %117, %34 : vector<1x128xf32>
      %123 = arith.subf %70, %122 : vector<1x128xf32>
      %124 = arith.mulf %31, %96 : vector<1x128xf32>
      %125 = arith.mulf %124, %31 : vector<1x128xf32>
      %126 = arith.subf %73, %125 : vector<1x128xf32>
      %127 = arith.mulf %124, %34 : vector<1x128xf32>
      %128 = arith.subf %76, %127 : vector<1x128xf32>
      %129 = arith.mulf %34, %96 : vector<1x128xf32>
      %130 = arith.mulf %129, %34 : vector<1x128xf32>
      %131 = arith.subf %79, %130 : vector<1x128xf32>
      %132 = arith.mulf %90, %99 : vector<1x128xf32>
      %133 = arith.maximumf %99, %88 : vector<1x128xf32>
      %134 = tpu.reciprocal %133 {approx = true} : vector<1x128xf32> -> vector<1x128xf32>
      %135 = arith.mulf %133, %134 : vector<1x128xf32>
      %cst_30 = arith.constant 2.000000e+00 : f32
      %136 = vector.broadcast %cst_30 : f32 to vector<1x128xf32>
      %137 = arith.subf %136, %135 : vector<1x128xf32>
      %138 = arith.mulf %134, %137 : vector<1x128xf32>
      %139 = arith.mulf %101, %138 : vector<1x128xf32>
      %140 = arith.mulf %139, %101 : vector<1x128xf32>
      %141 = arith.subf %110, %140 : vector<1x128xf32>
      %142 = arith.mulf %139, %103 : vector<1x128xf32>
      %143 = arith.subf %112, %142 : vector<1x128xf32>
      %144 = arith.mulf %139, %105 : vector<1x128xf32>
      %145 = arith.subf %114, %144 : vector<1x128xf32>
      %146 = arith.mulf %139, %107 : vector<1x128xf32>
      %147 = arith.subf %116, %146 : vector<1x128xf32>
      %148 = arith.mulf %103, %138 : vector<1x128xf32>
      %149 = arith.mulf %148, %103 : vector<1x128xf32>
      %150 = arith.subf %119, %149 : vector<1x128xf32>
      %151 = arith.mulf %148, %105 : vector<1x128xf32>
      %152 = arith.subf %121, %151 : vector<1x128xf32>
      %153 = arith.mulf %148, %107 : vector<1x128xf32>
      %154 = arith.subf %123, %153 : vector<1x128xf32>
      %155 = arith.mulf %105, %138 : vector<1x128xf32>
      %156 = arith.mulf %155, %105 : vector<1x128xf32>
      %157 = arith.subf %126, %156 : vector<1x128xf32>
      %158 = arith.mulf %155, %107 : vector<1x128xf32>
      %159 = arith.subf %128, %158 : vector<1x128xf32>
      %160 = arith.mulf %107, %138 : vector<1x128xf32>
      %161 = arith.mulf %160, %107 : vector<1x128xf32>
      %162 = arith.subf %131, %161 : vector<1x128xf32>
      %163 = arith.mulf %132, %141 : vector<1x128xf32>
      %164 = arith.maximumf %141, %88 : vector<1x128xf32>
      %165 = tpu.reciprocal %164 {approx = true} : vector<1x128xf32> -> vector<1x128xf32>
      %166 = arith.mulf %164, %165 : vector<1x128xf32>
      %cst_31 = arith.constant 2.000000e+00 : f32
      %167 = vector.broadcast %cst_31 : f32 to vector<1x128xf32>
      %168 = arith.subf %167, %166 : vector<1x128xf32>
      %169 = arith.mulf %165, %168 : vector<1x128xf32>
      %170 = arith.mulf %143, %169 : vector<1x128xf32>
      %171 = arith.mulf %170, %143 : vector<1x128xf32>
      %172 = arith.subf %150, %171 : vector<1x128xf32>
      %173 = arith.mulf %170, %145 : vector<1x128xf32>
      %174 = arith.subf %152, %173 : vector<1x128xf32>
      %175 = arith.mulf %170, %147 : vector<1x128xf32>
      %176 = arith.subf %154, %175 : vector<1x128xf32>
      %177 = arith.mulf %145, %169 : vector<1x128xf32>
      %178 = arith.mulf %177, %145 : vector<1x128xf32>
      %179 = arith.subf %157, %178 : vector<1x128xf32>
      %180 = arith.mulf %177, %147 : vector<1x128xf32>
      %181 = arith.subf %159, %180 : vector<1x128xf32>
      %182 = arith.mulf %147, %169 : vector<1x128xf32>
      %183 = arith.mulf %182, %147 : vector<1x128xf32>
      %184 = arith.subf %162, %183 : vector<1x128xf32>
      %185 = arith.mulf %163, %172 : vector<1x128xf32>
      %186 = arith.maximumf %172, %88 : vector<1x128xf32>
      %187 = tpu.reciprocal %186 {approx = true} : vector<1x128xf32> -> vector<1x128xf32>
      %188 = arith.mulf %186, %187 : vector<1x128xf32>
      %cst_32 = arith.constant 2.000000e+00 : f32
      %189 = vector.broadcast %cst_32 : f32 to vector<1x128xf32>
      %190 = arith.subf %189, %188 : vector<1x128xf32>
      %191 = arith.mulf %187, %190 : vector<1x128xf32>
      %192 = arith.mulf %174, %191 : vector<1x128xf32>
      %193 = arith.mulf %192, %174 : vector<1x128xf32>
      %194 = arith.subf %179, %193 : vector<1x128xf32>
      %195 = arith.mulf %192, %176 : vector<1x128xf32>
      %196 = arith.subf %181, %195 : vector<1x128xf32>
      %197 = arith.mulf %176, %191 : vector<1x128xf32>
      %198 = arith.mulf %197, %176 : vector<1x128xf32>
      %199 = arith.subf %184, %198 : vector<1x128xf32>
      %200 = arith.mulf %185, %194 : vector<1x128xf32>
      %201 = arith.maximumf %194, %88 : vector<1x128xf32>
      %202 = tpu.reciprocal %201 {approx = true} : vector<1x128xf32> -> vector<1x128xf32>
      %203 = arith.mulf %201, %202 : vector<1x128xf32>
      %cst_33 = arith.constant 2.000000e+00 : f32
      %204 = vector.broadcast %cst_33 : f32 to vector<1x128xf32>
      %205 = arith.subf %204, %203 : vector<1x128xf32>
      %206 = arith.mulf %202, %205 : vector<1x128xf32>
      %207 = arith.mulf %196, %206 : vector<1x128xf32>
      %208 = arith.mulf %207, %196 : vector<1x128xf32>
      %209 = arith.subf %199, %208 : vector<1x128xf32>
      %210 = arith.mulf %200, %209 : vector<1x128xf32>
      %211 = math.absf %210 : vector<1x128xf32>
      %cst_34 = arith.constant 0x7F800000 : f32
      %212 = vector.broadcast %cst_34 : f32 to vector<1x128xf32>
      %213 = arith.cmpf olt, %211, %212 : vector<1x128xf32>
      %cst_35 = arith.constant 0.000000e+00 : f32
      %214 = vector.broadcast %cst_35 : f32 to vector<1x128xf32>
      %215 = arith.select %213, %210, %214 : vector<1x128xi1>, vector<1x128xf32>
      %cst_36 = arith.constant 0.000000e+00 : f32
      %216 = vector.broadcast %cst_36 : f32 to vector<1x128xf32>
      %217 = arith.maximumf %215, %216 : vector<1x128xf32>
      %218 = math.sqrt %217 : vector<1x128xf32>
      %cst_37 = arith.constant 1.000000e-01 : f32
      %219 = vector.broadcast %cst_37 : f32 to vector<1x128xf32>
      %220 = arith.minimumf %218, %219 : vector<1x128xf32>
      %cst_38 = arith.constant 1.000000e+01 : f32
      %221 = vector.broadcast %cst_38 : f32 to vector<1x128xf32>
      %222 = arith.mulf %220, %221 : vector<1x128xf32>
      %cst_39 = arith.constant 1.000000e+00 : f32
      %223 = vector.broadcast %cst_39 : f32 to vector<1x128xf32>
      %224 = arith.subf %223, %222 : vector<1x128xf32>
      %c0_40 = arith.constant 0 : index
      %225 = arith.index_cast %2 : i32 to index
      %226 = vector.load %arg4[%c0_40, %225] : memref<1x256xf32, #tpu.memory_space<vmem>>, vector<1x128xf32>
      tpu.vector_store %arg4[%c0_40, %225], %224 {strides = array<i32>} : memref<1x256xf32, #tpu.memory_space<vmem>>, vector<1x128xf32>,
    }
    %c2_i32_0 = arith.constant 2 : i32
    return
  }
  func.func @transform_0(%arg0: i32) -> (i32, i32) {
    %c0_i32 = arith.constant 0 : i32
    %c0_i32_0 = arith.constant 0 : i32
    return %arg0, %c0_i32 : i32, i32
  }
  func.func @transform_1(%arg0: i32) -> (i32, i32) {
    %c0_i32 = arith.constant 0 : i32
    %c0_i32_0 = arith.constant 0 : i32
    %c0_i32_1 = arith.constant 0 : i32
    return %c0_i32, %c0_i32_0 : i32, i32
  }
  func.func @transform_2(%arg0: i32) -> (i32, i32) {
    %c0_i32 = arith.constant 0 : i32
    %c0_i32_0 = arith.constant 0 : i32
    %c0_i32_1 = arith.constant 0 : i32
    return %c0_i32, %c0_i32_0 : i32, i32
  }
  func.func @transform_3(%arg0: i32) -> (i32, i32) {
    %c0_i32 = arith.constant 0 : i32
    %c0_i32_0 = arith.constant 0 : i32
    return %c0_i32, %arg0 : i32, i32
  }
}

</mosaic_0001>

<llo_original>
// kernel: tpu_custom_call.1
$region0: #{tpu_custom_call.1}
  #allocation0 [shape = 'u32[]', space=smem, size = 0x4, offset = 0x4, fixed_abs, tag = 'smem constant byte address 0x4 - core index']
  #allocation1 [shape = 'u32[144,128]{1,0:T(1,128)}', space=vmem, size = 0x12000, scoped, tag = 'internal scratch']
  %s0 = inlined_call_operand.vmem [shape: f32[256,7], index: 0, kind: input, shape index: {}]
  %s1 = inlined_call_operand.vmem [shape: f32[48,7], index: 1, kind: input, shape index: {}]
  %s2 = inlined_call_operand.vmem [shape: f32[48,1], index: 2, kind: input, shape index: {}]
  %s3 = inlined_call_operand.hbm [shape: f32[1,256], index: 3, kind: output, shape index: {}]
  %s4 = sld [smem:[#allocation0]]
  $region29: #{tpu_custom_call.1} parent=0
    _
  %s6 = ssub.s32 1, %s4
  %s7 = scalar_select 0, %s6, %s4
  $region1: #{tpu_custom_call.1} parent=0
    #allocation2 [shape = 'u8[1024]{0}', space=vmem, size = 0x400, scoped, tag = 'output window, operand 0, single buffered']
    #allocation3 [shape = 's32[1]{0}', space=sflag, size = 0x4, scoped, tag = 'scoped memory for tpu_custom_call.1']
    %8 = vsyncpa [#allocation3], 0
    // Predicated region
    $region2: #{tpu_custom_call.1} parent=1 // pred_check
      _
    $region3: #{tpu_custom_call.1} parent=1 // pred_check_branch
      %10 = sbr.rel (0) target = $region5
    $region4: #{tpu_custom_call.1} parent=1 // pred_region
      _
    $region5: #{tpu_custom_call.1} parent=1 // pred_fallthru
      _
    // Predicated region
    $region6: #{tpu_custom_call.1} parent=1 // pred_check
      _
    $region7: #{tpu_custom_call.1} parent=1 // pred_check_branch
      %12 = sbr.rel (0) target = $region9
    $region8: #{tpu_custom_call.1} parent=1 // pred_region
      _
    $region9: #{tpu_custom_call.1} parent=1 // pred_fallthru
      _
    // Predicated region
    $region10: #{tpu_custom_call.1} parent=1 // pred_check
      _
    $region11: #{tpu_custom_call.1} parent=1 // pred_check_branch
      %14 = sbr.rel (0) target = $region13
    $region12: #{tpu_custom_call.1} parent=1 // pred_region
      _
    $region13: #{tpu_custom_call.1} parent=1 // pred_fallthru
      _
    loop: start=0, step=1, limit=2
    $region14: #{tpu_custom_call.1} parent=1 // loop_pre_header
      _
    $region15: #{tpu_custom_call.1} parent=1 // loop_header
      %s16 = sphi 0, %s20
      %p17 = scmp.ge.s32.totalorder %s16, 2
    $region16: #{tpu_custom_call.1} parent=1 // loop_header_branch
      %19 = sbr.rel (%p17) target = $region20
    $region17: #{tpu_custom_call.1} parent=1 // loop_body
      %s21 = smul.u32 %s16, 128
      %s22 = scalar_lea.vmem %s0, %s21
      %v23 = vld [vmem:[%s22] sm:$0xff]
      %v24 = vld [vmem:[%s22 + $0x8] sm:$0xff]
      %v25 = vld [vmem:[%s22 + $0x10] sm:$0xff]
      %v26 = vld [vmem:[%s22 + $0x18] sm:$0xff]
      %v27 = vld [vmem:[%s22 + $0x20] sm:$0xff]
      %v28 = vld [vmem:[%s22 + $0x28] sm:$0xff]
      %v29 = vld [vmem:[%s22 + $0x30] sm:$0xff]
      %v30 = vld [vmem:[%s22 + $0x38] sm:$0xff]
      %v31 = vld [vmem:[%s22 + $0x40] sm:$0xff]
      %v32 = vld [vmem:[%s22 + $0x48] sm:$0xff]
      %v33 = vld [vmem:[%s22 + $0x50] sm:$0xff]
      %v34 = vld [vmem:[%s22 + $0x58] sm:$0xff]
      %v35 = vld [vmem:[%s22 + $0x60] sm:$0xff]
      %v36 = vld [vmem:[%s22 + $0x68] sm:$0xff]
      %v37 = vld [vmem:[%s22 + $0x70] sm:$0xff]
      %v38 = vld [vmem:[%s22 + $0x78] sm:$0xff]
      %v39 = vld [vmem:[%s1] sm:$0xff]
      %v40 = vld [vmem:[%s1 + $0x8] sm:$0xff]
      %v41 = vld [vmem:[%s1 + $0x10] sm:$0xff]
      %v42 = vld [vmem:[%s1 + $0x18] sm:$0xff]
      %v43 = vld [vmem:[%s1 + $0x20] sm:$0xff]
      %v44 = vld [vmem:[%s1 + $0x28] sm:$0xff]
      %v45 = vld [vmem:[%s2] sm:$0xff]
      %v46 = vld [vmem:[%s2 + $0x8] sm:$0xff]
      %v47 = vld [vmem:[%s2 + $0x10] sm:$0xff]
      %v48 = vld [vmem:[%s2 + $0x18] sm:$0xff]
      %v49 = vld [vmem:[%s2 + $0x20] sm:$0xff]
      %v50 = vld [vmem:[%s2 + $0x28] sm:$0xff]
      %52 = vset.pattern.permute.xlu0 0
      %53 = vperm.xlu0 %52, %v45
      %v54 = vpop.permute.xlu0 %53
      %57 = vset.pattern.permute.xlu0 0
      %58 = vperm.xlu0 %57, %v46
      %v59 = vpop.permute.xlu0 %58
      %62 = vset.pattern.permute.xlu0 0
      %63 = vperm.xlu0 %62, %v47
      %v64 = vpop.permute.xlu0 %63
      %67 = vset.pattern.permute.xlu0 0
      %68 = vperm.xlu0 %67, %v48
      %v69 = vpop.permute.xlu0 %68
      %72 = vset.pattern.permute.xlu0 0
      %73 = vperm.xlu0 %72, %v49
      %v74 = vpop.permute.xlu0 %73
      %77 = vset.pattern.permute.xlu0 0
      %78 = vperm.xlu0 %77, %v50
      %v79 = vpop.permute.xlu0 %78
      %vm81 = vcmask 56320
      %v83 = vsel %vm81, %v39, 0
      %v86 = vsel %vm81, %v40, 0
      %v89 = vsel %vm81, %v41, 0
      %v92 = vsel %vm81, %v42, 0
      %v95 = vsel %vm81, %v43, 0
      %v98 = vsel %vm81, %v44, 0
      %v101 = vsel %vm81, %v23, 0
      %v104 = vsel %vm81, %v24, 0
      %v107 = vsel %vm81, %v25, 0
      %v110 = vsel %vm81, %v26, 0
      %v113 = vsel %vm81, %v27, 0
      %v116 = vsel %vm81, %v28, 0
      %v119 = vsel %vm81, %v29, 0
      %v122 = vsel %vm81, %v30, 0
      %v125 = vsel %vm81, %v31, 0
      %v128 = vsel %vm81, %v32, 0
      %v131 = vsel %vm81, %v33, 0
      %v134 = vsel %vm81, %v34, 0
      %v137 = vsel %vm81, %v35, 0
      %v140 = vsel %vm81, %v36, 0
      %v143 = vsel %vm81, %v37, 0
      %v146 = vsel %vm81, %v38, 0
      %148 = vmatprep.subr.mxu0 0.0
      %149 = vmatpush1.xpose.msra.mxu0 %v146
      %150 = vmatprep.subr.mxu0 0.0
      %151 = vmatpush1.xpose.msra.mxu0 %v143
      %152 = vmatprep.subr.mxu0 0.0
      %153 = vmatpush1.xpose.msra.mxu0 %v140
      %154 = vmatprep.subr.mxu0 0.0
      %155 = vmatpush1.xpose.msra.mxu0 %v137
      %156 = vmatprep.subr.mxu0 0.0
      %157 = vmatpush1.xpose.msra.mxu0 %v134
      %158 = vmatprep.subr.mxu0 0.0
      %159 = vmatpush1.xpose.msra.mxu0 %v131
      %160 = vmatprep.subr.mxu0 0.0
      %161 = vmatpush1.xpose.msra.mxu0 %v128
      %162 = vmatprep.subr.mxu0 0.0
      %163 = vmatpush1.xpose.msra.mxu0 %v125
      %164 = vmatprep.subr.mxu0 0.0
      %165 = vmatpush1.xpose.msra.mxu0 %v122
      %166 = vmatprep.subr.mxu0 0.0
      %167 = vmatpush1.xpose.msra.mxu0 %v119
      %168 = vmatprep.subr.mxu0 0.0
      %169 = vmatpush1.xpose.msra.mxu0 %v116
      %170 = vmatprep.subr.mxu0 0.0
      %171 = vmatpush1.xpose.msra.mxu0 %v113
      %172 = vmatprep.subr.mxu0 0.0
      %173 = vmatpush1.xpose.msra.mxu0 %v110
      %174 = vmatprep.subr.mxu0 0.0
      %175 = vmatpush1.xpose.msra.mxu0 %v107
      %176 = vmatprep.subr.mxu0 0.0
      %177 = vmatpush1.xpose.msra.mxu0 %v104
      %178 = vmatprep.subr.mxu0 0.0
      %179 = vmatpush1.xpose.msra.mxu0 %v101
      %180 = vmatprep.subr.mxu0 0.0
      %181 = vmatpush2.xpose.msra.mxu0 0.0
      %182 = vmatprep.subr.mxu0 0.0
      %183 = vmatpush2.xpose.msra.mxu0 0.0
      %184 = vmatprep.subr.mxu0 0.0
      %185 = vmatpush2.xpose.msra.mxu0 0.0
      %186 = vmatprep.subr.mxu0 0.0
      %187 = vmatpush2.xpose.msra.mxu0 0.0
      %188 = vmatprep.subr.mxu0 0.0
      %189 = vmatpush2.xpose.msra.mxu0 0.0
      %190 = vmatprep.subr.mxu0 0.0
      %191 = vmatpush2.xpose.msra.mxu0 0.0
      %192 = vmatprep.subr.mxu0 0.0
      %193 = vmatpush2.xpose.msra.mxu0 0.0
      %194 = vmatprep.subr.mxu0 0.0
      %195 = vmatpush2.xpose.msra.mxu0 0.0
      %196 = vmatprep.subr.mxu0 0.0
      %197 = vmatpush2.xpose.msra.mxu0 0.0
      %198 = vmatprep.subr.mxu0 0.0
      %199 = vmatpush2.xpose.msra.mxu0 0.0
      %200 = vmatprep.subr.mxu0 0.0
      %201 = vmatpush2.xpose.msra.mxu0 0.0
      %202 = vmatprep.subr.mxu0 0.0
      %203 = vmatpush2.xpose.msra.mxu0 0.0
      %204 = vmatprep.subr.mxu0 0.0
      %205 = vmatpush2.xpose.msra.mxu0 0.0
      %206 = vmatprep.subr.mxu0 0.0
      %207 = vmatpush2.xpose.msra.mxu0 0.0
      %208 = vmatprep.subr.mxu0 0.0
      %209 = vmatpush2.xpose.msra.mxu0 0.0
      %210 = vmatprep.subr.mxu0 0.0
      %211 = vmatpush2.xpose.msra.mxu0 0.0
      %212 = vmatprep.mubr.f32.mxu0 0.0
      %213 = vmatmul.mubr.f32.gmra.mxu0 %v83
      %v214 = vpop.f32.mrf.mxu0
      %v215 = vadd.f32 %v54, %v214
      %v216 = vpop.f32.mrf.mxu0
      %217 = vmatprep.mubr.f32.mxu0 0.0
      %218 = vmatmul.mubr.f32.gmra.mxu0 %v86
      %v219 = vpop.f32.mrf.mxu0
      %v220 = vadd.f32 %v59, %v219
      %v221 = vpop.f32.mrf.mxu0
      %222 = vmatprep.mubr.f32.mxu0 0.0
      %223 = vmatmul.mubr.f32.gmra.mxu0 %v89
      %v224 = vpop.f32.mrf.mxu0
      %v225 = vadd.f32 %v64, %v224
      %v226 = vpop.f32.mrf.mxu0
      %227 = vmatprep.mubr.f32.mxu0 0.0
      %228 = vmatmul.mubr.f32.gmra.mxu0 %v92
      %v229 = vpop.f32.mrf.mxu0
      %v230 = vadd.f32 %v69, %v229
      %v231 = vpop.f32.mrf.mxu0
      %232 = vmatprep.mubr.f32.mxu0 0.0
      %233 = vmatmul.mubr.f32.gmra.mxu0 %v95
      %v234 = vpop.f32.mrf.mxu0
      %v235 = vadd.f32 %v74, %v234
      %v236 = vpop.f32.mrf.mxu0
      %237 = vmatprep.mubr.f32.mxu0 0.0
      %238 = vmatmul.mubr.f32.gmra.mxu0 %v98
      %v239 = vpop.f32.mrf.mxu0
      %v240 = vadd.f32 %v79, %v239
      %v241 = vpop.f32.mrf.mxu0
      %242 = vdwg.mxu0
      %v243 = vtanh.pop %v215
      %v244 = vtanh.pop %v220
      %v245 = vtanh.pop %v225
      %v246 = vtanh.pop %v230
      %v247 = vtanh.pop %v235
      %v248 = vtanh.pop %v240
      %v249 = vmul.f32 %v243, %v243
      %v250 = vrot.slane %v249, 4
      %v251 = vadd.f32 %v249, %v250
      %v252 = vrot.slane %v251, 2
      %v253 = vadd.f32 %v251, %v252
      %v254 = vrot.slane %v253, 1
      %v255 = vadd.f32 %v253, %v254
      %v256 = vmul.f32 %v243, %v244
      %v257 = vrot.slane %v256, 4
      %v258 = vadd.f32 %v256, %v257
      %v259 = vrot.slane %v258, 2
      %v260 = vadd.f32 %v258, %v259
      %v261 = vrot.slane %v260, 1
      %v262 = vadd.f32 %v260, %v261
      %v263 = vmul.f32 %v243, %v245
      %v264 = vrot.slane %v263, 4
      %v265 = vadd.f32 %v263, %v264
      %v266 = vrot.slane %v265, 2
      %v267 = vadd.f32 %v265, %v266
      %v268 = vrot.slane %v267, 1
      %v269 = vadd.f32 %v267, %v268
      %v270 = vmul.f32 %v243, %v246
      %v271 = vrot.slane %v270, 4
      %v272 = vadd.f32 %v270, %v271
      %v273 = vrot.slane %v272, 2
      %v274 = vadd.f32 %v272, %v273
      %v275 = vrot.slane %v274, 1
      %v276 = vadd.f32 %v274, %v275
      %v277 = vmul.f32 %v243, %v247
      %v278 = vrot.slane %v277, 4
      %v279 = vadd.f32 %v277, %v278
      %v280 = vrot.slane %v279, 2
      %v281 = vadd.f32 %v279, %v280
      %v282 = vrot.slane %v281, 1
      %v283 = vadd.f32 %v281, %v282
      %v284 = vmul.f32 %v243, %v248
      %v285 = vrot.slane %v284, 4
      %v286 = vadd.f32 %v284, %v285
      %v287 = vrot.slane %v286, 2
      %v288 = vadd.f32 %v286, %v287
      %v289 = vrot.slane %v288, 1
      %v290 = vadd.f32 %v288, %v289
      %v291 = vmul.f32 %v244, %v244
      %v292 = vrot.slane %v291, 4
      %v293 = vadd.f32 %v291, %v292
      %v294 = vrot.slane %v293, 2
      %v295 = vadd.f32 %v293, %v294
      %v296 = vrot.slane %v295, 1
      %v297 = vadd.f32 %v295, %v296
      %v298 = vmul.f32 %v244, %v245
      %v299 = vrot.slane %v298, 4
      %v300 = vadd.f32 %v298, %v299
      %v301 = vrot.slane %v300, 2
      %v302 = vadd.f32 %v300, %v301
      %v303 = vrot.slane %v302, 1
      %v304 = vadd.f32 %v302, %v303
      %v305 = vmul.f32 %v244, %v246
      %v306 = vrot.slane %v305, 4
      %v307 = vadd.f32 %v305, %v306
      %v308 = vrot.slane %v307, 2
      %v309 = vadd.f32 %v307, %v308
      %v310 = vrot.slane %v309, 1
      %v311 = vadd.f32 %v309, %v310
      %v312 = vmul.f32 %v244, %v247
      %v313 = vrot.slane %v312, 4
      %v314 = vadd.f32 %v312, %v313
      %v315 = vrot.slane %v314, 2
      %v316 = vadd.f32 %v314, %v315
      %v317 = vrot.slane %v316, 1
      %v318 = vadd.f32 %v316, %v317
      %v319 = vmul.f32 %v244, %v248
      %v320 = vrot.slane %v319, 4
      %v321 = vadd.f32 %v319, %v320
      %v322 = vrot.slane %v321, 2
      %v323 = vadd.f32 %v321, %v322
      %v324 = vrot.slane %v323, 1
      %v325 = vadd.f32 %v323, %v324
      %v326 = vmul.f32 %v245, %v245
      %v327 = vrot.slane %v326, 4
      %v328 = vadd.f32 %v326, %v327
      %v329 = vrot.slane %v328, 2
      %v330 = vadd.f32 %v328, %v329
      %v331 = vrot.slane %v330, 1
      %v332 = vadd.f32 %v330, %v331
      %v333 = vmul.f32 %v245, %v246
      %v334 = vrot.slane %v333, 4
      %v335 = vadd.f32 %v333, %v334
      %v336 = vrot.slane %v335, 2
      %v337 = vadd.f32 %v335, %v336
      %v338 = vrot.slane %v337, 1
      %v339 = vadd.f32 %v337, %v338
      %v340 = vmul.f32 %v245, %v247
      %v341 = vrot.slane %v340, 4
      %v342 = vadd.f32 %v340, %v341
      %v343 = vrot.slane %v342, 2
      %v344 = vadd.f32 %v342, %v343
      %v345 = vrot.slane %v344, 1
      %v346 = vadd.f32 %v344, %v345
      %v347 = vmul.f32 %v245, %v248
      %v348 = vrot.slane %v347, 4
      %v349 = vadd.f32 %v347, %v348
      %v350 = vrot.slane %v349, 2
      %v351 = vadd.f32 %v349, %v350
      %v352 = vrot.slane %v351, 1
      %v353 = vadd.f32 %v351, %v352
      %v354 = vmul.f32 %v246, %v246
      %v355 = vrot.slane %v354, 4
      %v356 = vadd.f32 %v354, %v355
      %v357 = vrot.slane %v356, 2
      %v358 = vadd.f32 %v356, %v357
      %v359 = vrot.slane %v358, 1
      %v360 = vadd.f32 %v358, %v359
      %v361 = vmul.f32 %v246, %v247
      %v362 = vrot.slane %v361, 4
      %v363 = vadd.f32 %v361, %v362
      %v364 = vrot.slane %v363, 2
      %v365 = vadd.f32 %v363, %v364
      %v366 = vrot.slane %v365, 1
      %v367 = vadd.f32 %v365, %v366
      %v368 = vmul.f32 %v246, %v248
      %v369 = vrot.slane %v368, 4
      %v370 = vadd.f32 %v368, %v369
      %v371 = vrot.slane %v370, 2
      %v372 = vadd.f32 %v370, %v371
      %v373 = vrot.slane %v372, 1
      %v374 = vadd.f32 %v372, %v373
      %v375 = vmul.f32 %v247, %v247
      %v376 = vrot.slane %v375, 4
      %v377 = vadd.f32 %v375, %v376
      %v378 = vrot.slane %v377, 2
      %v379 = vadd.f32 %v377, %v378
      %v380 = vrot.slane %v379, 1
      %v381 = vadd.f32 %v379, %v380
      %v382 = vmul.f32 %v247, %v248
      %v383 = vrot.slane %v382, 4
      %v384 = vadd.f32 %v382, %v383
      %v385 = vrot.slane %v384, 2
      %v386 = vadd.f32 %v384, %v385
      %v387 = vrot.slane %v386, 1
      %v388 = vadd.f32 %v386, %v387
      %v389 = vmul.f32 %v248, %v248
      %v390 = vrot.slane %v389, 4
      %v391 = vadd.f32 %v389, %v390
      %v392 = vrot.slane %v391, 2
      %v393 = vadd.f32 %v391, %v392
      %v394 = vrot.slane %v393, 1
      %v395 = vadd.f32 %v393, %v394
      %v396 = vadd.f32 %v255, %v297
      %v397 = vadd.f32 %v396, %v332
      %v398 = vadd.f32 %v397, %v360
      %v399 = vadd.f32 %v398, %v381
      %v400 = vadd.f32 %v399, %v395
      %v401 = vmul.f32 %v400, 1e-12
      %v402 = vadd.f32 %v401, 1e-30
      %v403 = vmax.f32 %v255, %v402
      %v404 = vrcp.pop %v403
      %v405 = vmul.f32 %v403, %v404
      %v406 = vsub.f32 2.0, %v405
      %v407 = vmul.f32 %v404, %v406
      %v408 = vmul.f32 %v262, %v407
      %v409 = vmul.f32 %v408, %v262
      %v410 = vsub.f32 %v297, %v409
      %v411 = vmul.f32 %v408, %v269
      %v412 = vsub.f32 %v304, %v411
      %v413 = vmul.f32 %v408, %v276
      %v414 = vsub.f32 %v311, %v413
      %v415 = vmul.f32 %v408, %v283
      %v416 = vsub.f32 %v318, %v415
      %v417 = vmul.f32 %v408, %v290
      %v418 = vsub.f32 %v325, %v417
      %v419 = vmul.f32 %v269, %v407
      %v420 = vmul.f32 %v419, %v269
      %v421 = vsub.f32 %v332, %v420
      %v422 = vmul.f32 %v419, %v276
      %v423 = vsub.f32 %v339, %v422
      %v424 = vmul.f32 %v419, %v283
      %v425 = vsub.f32 %v346, %v424
      %v426 = vmul.f32 %v419, %v290
      %v427 = vsub.f32 %v353, %v426
      %v428 = vmul.f32 %v276, %v407
      %v429 = vmul.f32 %v428, %v276
      %v430 = vsub.f32 %v360, %v429
      %v431 = vmul.f32 %v428, %v283
      %v432 = vsub.f32 %v367, %v431
      %v433 = vmul.f32 %v428, %v290
      %v434 = vsub.f32 %v374, %v433
      %v435 = vmul.f32 %v283, %v407
      %v436 = vmul.f32 %v435, %v283
      %v437 = vsub.f32 %v381, %v436
      %v438 = vmul.f32 %v435, %v290
      %v439 = vsub.f32 %v388, %v438
      %v440 = vmul.f32 %v290, %v407
      %v441 = vmul.f32 %v440, %v290
      %v442 = vsub.f32 %v395, %v441
      %v443 = vmul.f32 %v255, %v410
      %v444 = vmax.f32 %v410, %v402
      %v445 = vrcp.pop %v444
      %v446 = vmul.f32 %v444, %v445
      %v447 = vsub.f32 2.0, %v446
      %v448 = vmul.f32 %v445, %v447
      %v449 = vmul.f32 %v412, %v448
      %v450 = vmul.f32 %v449, %v412
      %v451 = vsub.f32 %v421, %v450
      %v452 = vmul.f32 %v449, %v414
      %v453 = vsub.f32 %v423, %v452
      %v454 = vmul.f32 %v449, %v416
      %v455 = vsub.f32 %v425, %v454
      %v456 = vmul.f32 %v449, %v418
      %v457 = vsub.f32 %v427, %v456
      %v458 = vmul.f32 %v414, %v448
      %v459 = vmul.f32 %v458, %v414
      %v460 = vsub.f32 %v430, %v459
      %v461 = vmul.f32 %v458, %v416
      %v462 = vsub.f32 %v432, %v461
      %v463 = vmul.f32 %v458, %v418
      %v464 = vsub.f32 %v434, %v463
      %v465 = vmul.f32 %v416, %v448
      %v466 = vmul.f32 %v465, %v416
      %v467 = vsub.f32 %v437, %v466
      %v468 = vmul.f32 %v465, %v418
      %v469 = vsub.f32 %v439, %v468
      %v470 = vmul.f32 %v418, %v448
      %v471 = vmul.f32 %v470, %v418
      %v472 = vsub.f32 %v442, %v471
      %v473 = vmul.f32 %v443, %v451
      %v474 = vmax.f32 %v451, %v402
      %v475 = vrcp.pop %v474
      %v476 = vmul.f32 %v474, %v475
      %v477 = vsub.f32 2.0, %v476
      %v478 = vmul.f32 %v475, %v477
      %v479 = vmul.f32 %v453, %v478
      %v480 = vmul.f32 %v479, %v453
      %v481 = vsub.f32 %v460, %v480
      %v482 = vmul.f32 %v479, %v455
      %v483 = vsub.f32 %v462, %v482
      %v484 = vmul.f32 %v479, %v457
      %v485 = vsub.f32 %v464, %v484
      %v486 = vmul.f32 %v455, %v478
      %v487 = vmul.f32 %v486, %v455
      %v488 = vsub.f32 %v467, %v487
      %v489 = vmul.f32 %v486, %v457
      %v490 = vsub.f32 %v469, %v489
      %v491 = vmul.f32 %v457, %v478
      %v492 = vmul.f32 %v491, %v457
      %v493 = vsub.f32 %v472, %v492
      %v494 = vmul.f32 %v473, %v481
      %v495 = vmax.f32 %v481, %v402
      %v496 = vrcp.pop %v495
      %v497 = vmul.f32 %v495, %v496
      %v498 = vsub.f32 2.0, %v497
      %v499 = vmul.f32 %v496, %v498
      %v500 = vmul.f32 %v483, %v499
      %v501 = vmul.f32 %v500, %v483
      %v502 = vsub.f32 %v488, %v501
      %v503 = vmul.f32 %v500, %v485
      %v504 = vsub.f32 %v490, %v503
      %v505 = vmul.f32 %v485, %v499
      %v506 = vmul.f32 %v505, %v485
      %v507 = vsub.f32 %v493, %v506
      %v508 = vmul.f32 %v494, %v502
      %v509 = vmax.f32 %v502, %v402
      %v510 = vrcp.pop %v509
      %v511 = vmul.f32 %v509, %v510
      %v512 = vsub.f32 2.0, %v511
      %v513 = vmul.f32 %v510, %v512
      %v514 = vmul.f32 %v504, %v513
      %v515 = vmul.f32 %v514, %v504
      %v516 = vsub.f32 %v507, %v515
      %v517 = vmul.f32 %v508, %v516
      %v518 = vand.u32 2147483647, %v517
      %vm519 = vcmp.lt.f32.partialorder %v518, inf
      %v520 = vsel %vm519, %v517, 0.0
      %v521 = vmax.f32 %v520, 0.0
      %v522 = vrsqrt.pop %v521
      %v523 = vmul.f32 %v521, %v522
      %vm524 = vcmp.eq.f32.partialorder %v521, inf
      %v525 = vsel %vm524, %v521, %v523
      %vm526 = vcmp.eq.f32.partialorder %v521, 0.0
      %v527 = vand.u32 %v521, 2147483648
      %v528 = vsel %vm526, %v527, %v525
      %v529 = vmin.f32 %v528, 0.1
      %v530 = vmul.f32 %v529, 10.0
      %v531 = vsub.f32 1.0, %v530
      %s532 = sshra.s32 %s21, 7
      %s533 = sand.u32 %s21, 127
      %s534 = scalar_lea.vmem [#allocation2], %s532
      %v535 = vlaneseq
      %vm536 = vcmp.ge.s32.totalorder %v535, 0
      %vm537 = vcmp.lt.s32.totalorder %v535, 128
      %vm538 = vmand %vm536, %vm537
      %539 = vst.msk [vmem:[%s534] sm:$0x1] %vm538, %v531
    $region18: #{tpu_custom_call.1} parent=1 // loop_footer
      %s20 = sadd.s32 1, %s16
    $region19: #{tpu_custom_call.1} parent=1 // loop_footer_branch
      %15 = sbr.rel target = $region15
    $region20: #{tpu_custom_call.1} parent=1 // loop_exit
      _
    // Predicated region
    $region21: #{tpu_custom_call.1} parent=1 // pred_check
      _
    $region22: #{tpu_custom_call.1} parent=1 // pred_check_branch
      %541 = sbr.rel (0) target = $region24
    $region23: #{tpu_custom_call.1} parent=1 // pred_region
      %s543 = ssub.s32 32, 32
      %544 = vsyncadd [#allocation3], %s543
      %s546 = sshll.u32 [#allocation2], 4
      %s547 = int_to_ptr.vmem [resolvable:$true] %s546
      %549 = dma.vmem_to_hbm [thread:$0]  %s547, 32, %s3, [#allocation3]
    $region24: #{tpu_custom_call.1} parent=1 // pred_fallthru
      _
    // Predicated region
    $region25: #{tpu_custom_call.1} parent=1 // pred_check
      _
    $region26: #{tpu_custom_call.1} parent=1 // pred_check_branch
      %551 = sbr.rel (0) target = $region28
    $region27: #{tpu_custom_call.1} parent=1 // pred_region
      %552 = dma.done [#allocation3], 32
    $region28: #{tpu_custom_call.1} parent=1 // pred_fallthru
      _
    %553 = vsyncpa [#allocation3], 1

</llo_original>
